<compile_context>
chip_gen: v7x
topology: tpu7x:2x2x1
jax: 0.10.0
libtpu: 0.0.40
codegen_flags: <defaults>
</compile_context>

<pallas_src>
import numpy as np
import jax
import jax.numpy as jnp
from jax import lax
from jax.experimental import pallas as pl
from jax.experimental.pallas import tpu as pltpu


def resblock_kernel(x_ref, w1_ref, w2_ref, bias_ref, out_ref):
    # x_ref   : (N, H, W*Cin)        bf16  unpadded, lane-dense
    # w1_ref  : (3*W*Cin, 2*W*Cout)  bf16  banded [conv1*s1 | residual 1x1]
    # w2_ref  : (3*W*Cout, W*Cout)   bf16  banded conv2*s2
    # bias_ref: (2, W*Cout)          f32   [b1 tiled ; b2 tiled]
    # out_ref : (N*H, W*Cout)        f32   lane-dense
    N, H, WCin = x_ref.shape
    NH, WCout = out_ref.shape
    cdt = x_ref.dtype

    x = x_ref[...]

    # Vertical zero pad (pad=1 rows) in registers; horizontal pad is folded into
    # the banded weights, so lanes never get repacked.
    zrow = jnp.zeros((N, 1, WCin), cdt)
    xp = jnp.concatenate([zrow, x, zrow], axis=1)                # (N, H+2, W*Cin)

    # Three row-shifted slabs concatenated along lanes -> (N*H, 3*W*Cin).
    # The reshapes only merge leading dims (no lane<->sublane movement).
    slab1 = jnp.concatenate(
        [xp[:, dy:dy + H, :].reshape(NH, WCin) for dy in range(3)], axis=1)

    # ONE MXU pass: conv1 (BN1 scale folded in) and the residual 1x1 conv.
    fused = jnp.dot(slab1, w1_ref[...],
                    preferred_element_type=jnp.float32)          # (N*H, 2*W*Cout)
    acc1 = fused[:, :WCout]
    residual = fused[:, WCout:]

    b1 = bias_ref[0:1, :]
    b2 = bias_ref[1:2, :]
    y1 = jnp.maximum(acc1 + b1, 0.0)        # BN1 (folded) + ReLU; Dropout2d = id (eval)

    # conv2 via the same banded-matmul trick on y1 (kept lane-dense end to end).
    y1c = y1.astype(cdt).reshape(N, H, WCout)
    zrow2 = jnp.zeros((N, 1, WCout), cdt)
    y1p = jnp.concatenate([zrow2, y1c, zrow2], axis=1)           # (N, H+2, W*Cout)
    slab2 = jnp.concatenate(
        [y1p[:, dy:dy + H, :].reshape(NH, WCout) for dy in range(3)], axis=1)

    acc2 = jnp.dot(slab2, w2_ref[...],
                   preferred_element_type=jnp.float32)           # (N*H, W*Cout)
    y2 = jnp.maximum(acc2 + b2, 0.0)        # BN2 (folded) + ReLU

    out_ref[...] = residual + y2            # unmasked lane-dense (32, 128) vst


def resblock_forward_nhwc(x_nhwc, w1_banded, w2_banded, bias, Cout):
    """x_nhwc: (N, H, W, Cin) bf16.  Returns (N, H, W, Cout) f32."""
    N, H, W, Cin = x_nhwc.shape
    x_flat = x_nhwc.reshape(N, H, W * Cin)      # metadata-only reshape, no pre-pad

    out = pl.pallas_call(
        resblock_kernel,
        out_shape=jax.ShapeDtypeStruct((N * H, W * Cout), jnp.float32),
        grid=(1,),                               # both batch images in one step
        in_specs=[
            pl.BlockSpec((N, H, W * Cin), lambda i: (0, 0, 0)),
            pl.BlockSpec(w1_banded.shape, lambda i: (0, 0)),
            pl.BlockSpec(w2_banded.shape, lambda i: (0, 0)),
            pl.BlockSpec(bias.shape,      lambda i: (0, 0)),
        ],
        out_specs=pl.BlockSpec((N * H, W * Cout), lambda i: (0, 0)),
        compiler_params=pltpu.CompilerParams(dimension_semantics=("arbitrary",)),
    )(x_flat, w1_banded, w2_banded, bias)
    return out.reshape(N, H, W, Cout)


# -------------------- host-side banded weight construction --------------------
def build_banded_3x3(w_hwio_f32, W):
    """(3,3,Ci,Co) f32 -> block-banded (3*W*Ci, W*Co) f32 such that
    row-slab (N*H, 3*W*Ci) @ B == 3x3 'SAME' conv (horizontal pad folded in)."""
    _, _, Ci, Co = w_hwio_f32.shape
    K = W * Ci
    B = np.zeros((3 * K, W * Co), np.float32)
    for dy in range(3):
        for dx in range(3):
            for w in range(W):
                win = w + dx - 1                       # input column for this tap
                if 0 <= win < W:
                    B[dy * K + win * Ci: dy * K + (win + 1) * Ci,
                      w * Co: (w + 1) * Co] = w_hwio_f32[dy, dx]
    return B


def build_banded_1x1(w_io_f32, W):
    """(Ci,Co) 1x1 conv lifted onto the same (3*W*Ci, W*Co) row-slab layout
    (center row block dy=1, win=w) so it rides in the conv1 matmul for free."""
    Ci, Co = w_io_f32.shape
    K = W * Ci
    B = np.zeros((3 * K, W * Co), np.float32)
    for w in range(W):
        B[K + w * Ci: K + (w + 1) * Ci, w * Co: (w + 1) * Co] = w_io_f32
    return B


# ----------------------------- reference (pure JAX) -----------------------------
def _conv_nhwc(x, w_hwio, pad):
    return lax.conv_general_dilated(
        x, w_hwio, window_strides=(1, 1), padding=pad,
        dimension_numbers=('NHWC', 'HWIO', 'NHWC'),
        preferred_element_type=jnp.float32)


def resblock_reference(x_bf16, w1_hwio, w3a_scaled, w3b_scaled, b1, b2):
    """Same numerics as the kernel: bf16 MXU inputs, BN scale folded into weights,
    f32 accumulation/epilogue."""
    residual = _conv_nhwc(x_bf16, w1_hwio, 'VALID')
    y = _conv_nhwc(x_bf16, w3a_scaled, 'SAME')
    y = jnp.maximum(y + b1, 0.0)
    y = _conv_nhwc(y.astype(jnp.bfloat16), w3b_scaled, 'SAME')
    y = jnp.maximum(y + b2, 0.0)
    return residual + y


if __name__ == "__main__":
    N, Cin, Cout, H, W = 2, 4, 8, 16, 16
    eps = 1e-5

    key = jax.random.PRNGKey(0)
    ks = jax.random.split(key, 12)

    # PyTorch-shaped conv weights (Cout, Cin, kh, kw), bias=False, deterministic.
    w1_pt  = jax.random.normal(ks[0], (Cout, Cin, 1, 1), jnp.float32) / jnp.sqrt(1.0 * Cin)
    w3a_pt = jax.random.normal(ks[1], (Cout, Cin, 3, 3), jnp.float32) / jnp.sqrt(9.0 * Cin)
    w3b_pt = jax.random.normal(ks[2], (Cout, Cout, 3, 3), jnp.float32) / jnp.sqrt(9.0 * Cout)

    # BatchNorm (eval mode) parameters.
    gamma1 = 1.0 + 0.1 * jax.random.normal(ks[3], (Cout,), jnp.float32)
    beta1  = 0.1 * jax.random.normal(ks[4], (Cout,), jnp.float32)
    mean1  = 0.1 * jax.random.normal(ks[5], (Cout,), jnp.float32)
    var1   = jax.random.uniform(ks[6], (Cout,), jnp.float32, 0.5, 1.5)
    gamma2 = 1.0 + 0.1 * jax.random.normal(ks[7], (Cout,), jnp.float32)
    beta2  = 0.1 * jax.random.normal(ks[8], (Cout,), jnp.float32)
    mean2  = 0.1 * jax.random.normal(ks[9], (Cout,), jnp.float32)
    var2   = jax.random.uniform(ks[10], (Cout,), jnp.float32, 0.5, 1.5)

    # Fold BN (eval) into per-channel scale/bias, f32.
    scale1 = gamma1 / jnp.sqrt(var1 + eps); bias1 = beta1 - mean1 * scale1
    scale2 = gamma2 / jnp.sqrt(var2 + eps); bias2 = beta2 - mean2 * scale2

    # HWIO weights; fold BN scale into conv weights IN F32, cast to bf16 later.
    w1_hwio  = jnp.transpose(w1_pt,  (2, 3, 1, 0))            # (1,1,Cin,Cout)
    w3a_hwio = jnp.transpose(w3a_pt, (2, 3, 1, 0))            # (3,3,Cin,Cout)
    w3b_hwio = jnp.transpose(w3b_pt, (2, 3, 1, 0))            # (3,3,Cout,Cout)
    w3a_s = w3a_hwio * scale1[None, None, None, :]
    w3b_s = w3b_hwio * scale2[None, None, None, :]

    # Host-built banded weights; residual 1x1 fused as extra conv1 output columns.
    B_conv1 = build_banded_3x3(np.asarray(w3a_s), W)                     # (3*W*Cin, W*Cout)
    B_res   = build_banded_1x1(np.asarray(w1_hwio.reshape(Cin, Cout)), W)  # (3*W*Cin, W*Cout)
    B_conv2 = build_banded_3x3(np.asarray(w3b_s), W)                     # (3*W*Cout, W*Cout)
    w1_banded = jnp.asarray(np.concatenate([B_conv1, B_res], axis=1), jnp.bfloat16)
    w2_banded = jnp.asarray(B_conv2, jnp.bfloat16)

    # Biases pre-tiled lane-dense: (2, W*Cout) f32.
    bias = jnp.stack([jnp.tile(bias1, W), jnp.tile(bias2, W)], axis=0)

    # Input: PyTorch NCHW -> NHWC, bf16 for the MXU.
    x_nchw = jax.random.normal(ks[11], (N, Cin, H, W), jnp.float32)
    x_nhwc = jnp.transpose(x_nchw, (0, 2, 3, 1)).astype(jnp.bfloat16)

    out_nhwc = resblock_forward_nhwc(x_nhwc, w1_banded, w2_banded, bias, Cout)
    out_nhwc = jax.block_until_ready(out_nhwc)
    out_nchw = jnp.transpose(out_nhwc, (0, 3, 1, 2))          # back to PyTorch NCHW
    assert out_nchw.shape == (N, Cout, H, W)

    ref_nhwc = resblock_reference(
        x_nhwc,
        w1_hwio.astype(jnp.bfloat16),
        w3a_s.astype(jnp.bfloat16),
        w3b_s.astype(jnp.bfloat16),
        bias1, bias2)
    max_err = jnp.max(jnp.abs(out_nhwc - ref_nhwc))
    assert jnp.allclose(out_nhwc, ref_nhwc, rtol=1e-2, atol=1e-2), f"max err {max_err}"

    print("KERNEL_OK")
</pallas_src>

<mosaic_0001>
module attributes {stable_mosaic.version = 11 : i64} {
  func.func @resblock_kernel(%arg0: i32, %arg1: memref<2x16x64xbf16, #tpu.memory_space<vmem>>, %arg2: memref<192x256xbf16, #tpu.memory_space<vmem>>, %arg3: memref<384x128xbf16, #tpu.memory_space<vmem>>, %arg4: memref<2x128xf32, #tpu.memory_space<vmem>>, %arg5: memref<32x128xf32, #tpu.memory_space<vmem>>) attributes {dimension_semantics = [#tpu.dimension_semantics<arbitrary>], iteration_bounds = array<i64: 1>, scalar_prefetch = 0 : i64, scratch_operands = 0 : i64, tpu.core_type = #tpu.core_type<tc>, window_params = [{pipeline_mode = #tpu.pipeline_mode<synchronous>, transform_indices = @transform_0, window_bounds = array<i64: 2, 16, 64>}, {pipeline_mode = #tpu.pipeline_mode<synchronous>, transform_indices = @transform_1, window_bounds = array<i64: 192, 256>}, {pipeline_mode = #tpu.pipeline_mode<synchronous>, transform_indices = @transform_2, window_bounds = array<i64: 384, 128>}, {pipeline_mode = #tpu.pipeline_mode<synchronous>, transform_indices = @transform_3, window_bounds = array<i64: 2, 128>}, {pipeline_mode = #tpu.pipeline_mode<synchronous>, transform_indices = @transform_4, window_bounds = array<i64: 32, 128>}]} {
    %c0 = arith.constant 0 : index
    %c0_0 = arith.constant 0 : index
    %c0_1 = arith.constant 0 : index
    %0 = vector.load %arg1[%c0, %c0_0, %c0_1] : memref<2x16x64xbf16, #tpu.memory_space<vmem>>, vector<2x16x64xbf16>
    %cst = arith.constant 0.000000e+00 : bf16
    %1 = vector.broadcast %cst : bf16 to vector<2x1x64xbf16>
    %2 = tpu.concatenate %1, %0, %1 in 1 : vector<2x1x64xbf16>, vector<2x16x64xbf16>, vector<2x1x64xbf16> -> vector<2x18x64xbf16>
    %3 = vector.extract_strided_slice %2 {offsets = [0, 0, 0], sizes = [2, 16, 64], strides = [1, 1, 1]} : vector<2x18x64xbf16> to vector<2x16x64xbf16>
    %4 = vector.shape_cast %3 : vector<2x16x64xbf16> to vector<32x64xbf16>
    %5 = vector.extract_strided_slice %2 {offsets = [0, 1, 0], sizes = [2, 16, 64], strides = [1, 1, 1]} : vector<2x18x64xbf16> to vector<2x16x64xbf16>
    %6 = vector.shape_cast %5 : vector<2x16x64xbf16> to vector<32x64xbf16>
    %7 = vector.extract_strided_slice %2 {offsets = [0, 2, 0], sizes = [2, 16, 64], strides = [1, 1, 1]} : vector<2x18x64xbf16> to vector<2x16x64xbf16>
    %8 = vector.shape_cast %7 : vector<2x16x64xbf16> to vector<32x64xbf16>
    %9 = tpu.concatenate %4, %6, %8 in 1 : vector<32x64xbf16>, vector<32x64xbf16>, vector<32x64xbf16> -> vector<32x192xbf16>
    %c0_2 = arith.constant 0 : index
    %c0_3 = arith.constant 0 : index
    %10 = vector.load %arg2[%c0_2, %c0_3] : memref<192x256xbf16, #tpu.memory_space<vmem>>, vector<192x256xbf16>
    %cst_4 = arith.constant dense<0.000000e+00> : vector<32x256xf32>
    %11 = tpu.matmul %9, %10, %cst_4 {dimension_numbers = #tpu.dot_dimension_numbers<[1], [0], [0], [1], [0, 0, 1, 1], [], []>} : vector<32x192xbf16>, vector<192x256xbf16>, vector<32x256xf32> -> vector<32x256xf32>
    %12 = vector.extract_strided_slice %11 {offsets = [0, 0], sizes = [32, 128], strides = [1, 1]} : vector<32x256xf32> to vector<32x128xf32>
    %13 = vector.extract_strided_slice %11 {offsets = [0, 128], sizes = [32, 128], strides = [1, 1]} : vector<32x256xf32> to vector<32x128xf32>
    %c0_5 = arith.constant 0 : index
    %c0_6 = arith.constant 0 : index
    %14 = vector.load %arg4[%c0_5, %c0_6] : memref<2x128xf32, #tpu.memory_space<vmem>>, vector<1x128xf32>
    %c1 = arith.constant 1 : index
    %c0_7 = arith.constant 0 : index
    %15 = vector.load %arg4[%c1, %c0_7] : memref<2x128xf32, #tpu.memory_space<vmem>>, vector<1x128xf32>
    %16 = vector.broadcast %14 : vector<1x128xf32> to vector<32x128xf32>
    %17 = arith.addf %12, %16 : vector<32x128xf32>
    %cst_8 = arith.constant 0.000000e+00 : f32
    %18 = vector.broadcast %cst_8 : f32 to vector<32x128xf32>
    %19 = arith.maximumf %17, %18 : vector<32x128xf32>
    %20 = arith.truncf %19 : vector<32x128xf32> to vector<32x128xbf16>
    %21 = vector.shape_cast %20 : vector<32x128xbf16> to vector<2x16x128xbf16>
    %cst_9 = arith.constant 0.000000e+00 : bf16
    %22 = vector.broadcast %cst_9 : bf16 to vector<2x1x128xbf16>
    %23 = tpu.concatenate %22, %21, %22 in 1 : vector<2x1x128xbf16>, vector<2x16x128xbf16>, vector<2x1x128xbf16> -> vector<2x18x128xbf16>
    %24 = vector.extract_strided_slice %23 {offsets = [0, 0, 0], sizes = [2, 16, 128], strides = [1, 1, 1]} : vector<2x18x128xbf16> to vector<2x16x128xbf16>
    %25 = vector.shape_cast %24 : vector<2x16x128xbf16> to vector<32x128xbf16>
    %26 = vector.extract_strided_slice %23 {offsets = [0, 1, 0], sizes = [2, 16, 128], strides = [1, 1, 1]} : vector<2x18x128xbf16> to vector<2x16x128xbf16>
    %27 = vector.shape_cast %26 : vector<2x16x128xbf16> to vector<32x128xbf16>
    %28 = vector.extract_strided_slice %23 {offsets = [0, 2, 0], sizes = [2, 16, 128], strides = [1, 1, 1]} : vector<2x18x128xbf16> to vector<2x16x128xbf16>
    %29 = vector.shape_cast %28 : vector<2x16x128xbf16> to vector<32x128xbf16>
    %30 = tpu.concatenate %25, %27, %29 in 1 : vector<32x128xbf16>, vector<32x128xbf16>, vector<32x128xbf16> -> vector<32x384xbf16>
    %c0_10 = arith.constant 0 : index
    %c0_11 = arith.constant 0 : index
    %31 = vector.load %arg3[%c0_10, %c0_11] : memref<384x128xbf16, #tpu.memory_space<vmem>>, vector<384x128xbf16>
    %cst_12 = arith.constant dense<0.000000e+00> : vector<32x128xf32>
    %32 = tpu.matmul %30, %31, %cst_12 {dimension_numbers = #tpu.dot_dimension_numbers<[1], [0], [0], [1], [0, 0, 1, 1], [], []>} : vector<32x384xbf16>, vector<384x128xbf16>, vector<32x128xf32> -> vector<32x128xf32>
    %33 = vector.broadcast %15 : vector<1x128xf32> to vector<32x128xf32>
    %34 = arith.addf %32, %33 : vector<32x128xf32>
    %cst_13 = arith.constant 0.000000e+00 : f32
    %35 = vector.broadcast %cst_13 : f32 to vector<32x128xf32>
    %36 = arith.maximumf %34, %35 : vector<32x128xf32>
    %37 = arith.addf %13, %36 : vector<32x128xf32>
    %c0_14 = arith.constant 0 : index
    %c0_15 = arith.constant 0 : index
    %38 = vector.load %arg5[%c0_14, %c0_15] : memref<32x128xf32, #tpu.memory_space<vmem>>, vector<32x128xf32>
    tpu.vector_store %arg5[%c0_14, %c0_15], %37 {strides = array<i32>} : memref<32x128xf32, #tpu.memory_space<vmem>>, vector<32x128xf32>,
    return
  }
  func.func @transform_0(%arg0: i32) -> (i32, i32, i32) {
    %c0_i32 = arith.constant 0 : i32
    %c0_i32_0 = arith.constant 0 : i32
    %c0_i32_1 = arith.constant 0 : i32
    %c0_i32_2 = arith.constant 0 : i32
    return %c0_i32, %c0_i32_0, %c0_i32_1 : i32, i32, i32
  }
  func.func @transform_1(%arg0: i32) -> (i32, i32) {
    %c0_i32 = arith.constant 0 : i32
    %c0_i32_0 = arith.constant 0 : i32
    %c0_i32_1 = arith.constant 0 : i32
    return %c0_i32, %c0_i32_0 : i32, i32
  }
  func.func @transform_2(%arg0: i32) -> (i32, i32) {
    %c0_i32 = arith.constant 0 : i32
    %c0_i32_0 = arith.constant 0 : i32
    %c0_i32_1 = arith.constant 0 : i32
    return %c0_i32, %c0_i32_0 : i32, i32
  }
  func.func @transform_3(%arg0: i32) -> (i32, i32) {
    %c0_i32 = arith.constant 0 : i32
    %c0_i32_0 = arith.constant 0 : i32
    %c0_i32_1 = arith.constant 0 : i32
    return %c0_i32, %c0_i32_0 : i32, i32
  }
  func.func @transform_4(%arg0: i32) -> (i32, i32) {
    %c0_i32 = arith.constant 0 : i32
    %c0_i32_0 = arith.constant 0 : i32
    %c0_i32_1 = arith.constant 0 : i32
    return %c0_i32, %c0_i32_0 : i32, i32
  }
}

</mosaic_0001>

<llo_original>
// kernel: tpu_custom_call.1
$region0: #{tpu_custom_call.1}
  #allocation0 [shape = 'u32[]', space=smem, size = 0x4, offset = 0x4, fixed_abs, tag = 'smem constant byte address 0x4 - core index']
  #allocation1 [shape = 'u32[144,128]{1,0:T(1,128)}', space=vmem, size = 0x12000, scoped, tag = 'internal scratch']
  %s0 = inlined_call_operand.hbm [shape: bf16[2,16,64], index: 0, kind: input, shape index: {}]
  %s1 = inlined_call_operand.hbm [shape: bf16[192,256], index: 1, kind: input, shape index: {}]
  %s2 = inlined_call_operand.hbm [shape: bf16[384,128], index: 2, kind: input, shape index: {}]
  %s3 = inlined_call_operand.vmem [shape: f32[2,128], index: 3, kind: input, shape index: {}]
  %s4 = inlined_call_operand.hbm [shape: f32[32,128], index: 4, kind: output, shape index: {}]
  %s5 = sld [smem:[#allocation0]]
  $region38: #{tpu_custom_call.1} parent=0
    _
  %s7 = ssub.s32 1, %s5
  %s8 = scalar_select 0, %s7, %s5
  $region1: #{tpu_custom_call.1} parent=0
    #allocation2 [shape = 'u8[8192]{0}', space=vmem, size = 0x2000, scoped, tag = 'input window, operand 0, single buffered']
    #allocation3 [shape = 's32[1]{0}', space=sflag, size = 0x4, scoped, tag = 'scoped memory for tpu_custom_call.1']
    #allocation4 [shape = 's32[1]{0}', space=sflag, size = 0x4, scoped, tag = 'scoped memory for tpu_custom_call.1']
    #allocation5 [shape = 'u8[98304]{0}', space=vmem, size = 0x18000, scoped, tag = 'input window, operand 1, single buffered']
    #allocation6 [shape = 's32[1]{0}', space=sflag, size = 0x4, scoped, tag = 'scoped memory for tpu_custom_call.1']
    #allocation7 [shape = 'u8[98304]{0}', space=vmem, size = 0x18000, scoped, tag = 'input window, operand 2, single buffered']
    #allocation8 [shape = 'u8[16384]{0}', space=vmem, size = 0x4000, scoped, tag = 'output window, operand 0, single buffered']
    %9 = vsyncpa [#allocation3], 0
    %10 = vsyncpa [#allocation6], 0
    %11 = vsyncpa [#allocation4], 0
    // Predicated region
    $region2: #{tpu_custom_call.1} parent=1 // pred_check
      _
    $region3: #{tpu_custom_call.1} parent=1 // pred_check_branch
      %13 = sbr.rel (0) target = $region5
    $region4: #{tpu_custom_call.1} parent=1 // pred_region
      %s15 = ssub.s32 256, 256
      %16 = vsyncadd [#allocation3], %s15
      %s17 = sshll.u32 [#allocation2], 4
      %s18 = int_to_ptr.vmem [resolvable:$true] %s17
      %23 = dma.hbm_to_vmem [thread:$0]  %s0, 256, %s18, [#allocation3], 64, 64, 4
    $region5: #{tpu_custom_call.1} parent=1 // pred_fallthru
      _
    // Predicated region
    $region6: #{tpu_custom_call.1} parent=1 // pred_check
      _
    $region7: #{tpu_custom_call.1} parent=1 // pred_check_branch
      %25 = sbr.rel (0) target = $region9
    $region8: #{tpu_custom_call.1} parent=1 // pred_region
      %s27 = ssub.s32 3072, 3072
      %28 = vsyncadd [#allocation6], %s27
      %s29 = sshll.u32 [#allocation5], 4
      %s30 = int_to_ptr.vmem [resolvable:$true] %s29
      %35 = dma.hbm_to_vmem [thread:$0]  %s1, 3072, %s30, [#allocation6], 128, 128, 8
    $region9: #{tpu_custom_call.1} parent=1 // pred_fallthru
      _
    // Predicated region
    $region10: #{tpu_custom_call.1} parent=1 // pred_check
      _
    $region11: #{tpu_custom_call.1} parent=1 // pred_check_branch
      %37 = sbr.rel (0) target = $region13
    $region12: #{tpu_custom_call.1} parent=1 // pred_region
      %s39 = ssub.s32 3072, 3072
      %40 = vsyncadd [#allocation6], %s39
      %s41 = sshll.u32 [#allocation7], 4
      %s42 = int_to_ptr.vmem [resolvable:$true] %s41
      %47 = dma.hbm_to_vmem [thread:$0]  %s2, 3072, %s42, [#allocation6], 64, 64, 4
    $region13: #{tpu_custom_call.1} parent=1 // pred_fallthru
      _
    // Predicated region
    $region14: #{tpu_custom_call.1} parent=1 // pred_check
      _
    $region15: #{tpu_custom_call.1} parent=1 // pred_check_branch
      %49 = sbr.rel (0) target = $region17
    $region16: #{tpu_custom_call.1} parent=1 // pred_region
      _
    $region17: #{tpu_custom_call.1} parent=1 // pred_fallthru
      _
    // Predicated region
    $region18: #{tpu_custom_call.1} parent=1 // pred_check
      _
    $region19: #{tpu_custom_call.1} parent=1 // pred_check_branch
      %51 = sbr.rel (0) target = $region21
    $region20: #{tpu_custom_call.1} parent=1 // pred_region
      %52 = dma.done [#allocation3], 256
    $region21: #{tpu_custom_call.1} parent=1 // pred_fallthru
      _
    // Predicated region
    $region22: #{tpu_custom_call.1} parent=1 // pred_check
      _
    $region23: #{tpu_custom_call.1} parent=1 // pred_check_branch
      %54 = sbr.rel (0) target = $region25
    $region24: #{tpu_custom_call.1} parent=1 // pred_region
      %55 = dma.done [#allocation6], 3072
    $region25: #{tpu_custom_call.1} parent=1 // pred_fallthru
      _
    // Predicated region
    $region26: #{tpu_custom_call.1} parent=1 // pred_check
      _
    $region27: #{tpu_custom_call.1} parent=1 // pred_check_branch
      %57 = sbr.rel (0) target = $region29
    $region28: #{tpu_custom_call.1} parent=1 // pred_region
      %58 = dma.done [#allocation6], 3072
    $region29: #{tpu_custom_call.1} parent=1 // pred_fallthru
      _
    %v60 = vld [vmem:[#allocation2] sm:$0xf]
    %v61 = vld [vmem:[#allocation2 + $0x4] sm:$0xf]
    %v62 = vld [vmem:[#allocation2 + $0x8] sm:$0xf]
    %v63 = vld [vmem:[#allocation2 + $0xc] sm:$0xf]
    %v68 = vunpack.c.l.b16 %v60
    %v69 = vunpack.c.l.b16 %v61
    %v70 = vunpack.c.l.b16 %v62
    %v71 = vunpack.c.l.b16 %v63
    %v72 = vpack.c.b16 %v69, %v68
    %v73 = vpack.c.b16 %v71, %v70
    %v75 = vshrl.u32 %v72, 16
    %v77 = vrot.slane %v75, 7
    %v78 = vshll.u32 %v72, 16
    %v80 = vor.u32 %v77, %v78
    %v82 = vshrl.u32 %v73, 16
    %v84 = vrot.slane %v82, 7
    %v85 = vshll.u32 %v73, 16
    %v87 = vor.u32 %v84, %v85
    %vm92 = vcmask 1040384
    %vm93 = vsmask.f32 256
    %vm94 = vmand %vm92, %vm93
    %v95 = vsel %vm94, 0, %v80
    %v96 = vsel %vm94, 0, %v87
    %v97 = vsel %vm94, %v77, 0
    %v98 = vsel %vm94, %v84, 0
    %vm99 = vsmask.f32 7424
    %v101 = vshrl.u32 %v95, 16
    %v103 = vshll.u32 %v95, 16
    %v105 = vrot.slane %v103, 1
    %v106 = vor.u32 %v101, %v105
    %v108 = vshll.u32 %v97, 16
    %v110 = vrot.slane %v108, 1
    %v111 = vsel %vm99, %v106, %v110
    %v113 = vshrl.u32 %v96, 16
    %v115 = vshll.u32 %v96, 16
    %v117 = vrot.slane %v115, 1
    %v118 = vor.u32 %v113, %v117
    %v120 = vshll.u32 %v98, 16
    %v122 = vrot.slane %v120, 1
    %v123 = vsel %vm99, %v118, %v122
    %vm128 = vcmask 1046528
    %v129 = vrot.slane %v95, 1
    %v130 = vrot.slane %v97, 1
    %v131 = vsel %vm128, %v129, %v130
    %v132 = vrot.slane %v96, 1
    %v133 = vrot.slane %v98, 1
    %v134 = vsel %vm128, %v132, %v133
    %135 = vrot.lane.b32.xlu0 %v111, 64
    %v136 = vpop.permute.xlu0 %135
    %137 = vrot.lane.b32.xlu0 %v123, 64
    %v138 = vpop.permute.xlu0 %137
    %vm139 = vcmask 523264
    %v141 = vsel %vm139, %v95, %v136
    %v144 = vsel %vm139, %v96, %v138
    %v146 = vld [vmem:[#allocation5] sm:$0xff]
    %v147 = vld [vmem:[#allocation5 + $0x8] sm:$0xff]
    %v148 = vld [vmem:[#allocation5 + $0x10] sm:$0xff]
    %v149 = vld [vmem:[#allocation5 + $0x18] sm:$0xff]
    %v150 = vld [vmem:[#allocation5 + $0x20] sm:$0xff]
    %v151 = vld [vmem:[#allocation5 + $0x28] sm:$0xff]
    %v152 = vld [vmem:[#allocation5 + $0x30] sm:$0xff]
    %v153 = vld [vmem:[#allocation5 + $0x38] sm:$0xff]
    %v154 = vld [vmem:[#allocation5 + $0x40] sm:$0xff]
    %v155 = vld [vmem:[#allocation5 + $0x48] sm:$0xff]
    %v156 = vld [vmem:[#allocation5 + $0x50] sm:$0xff]
    %v157 = vld [vmem:[#allocation5 + $0x58] sm:$0xff]
    %v158 = vld [vmem:[#allocation5 + $0x60] sm:$0xff]
    %v159 = vld [vmem:[#allocation5 + $0x68] sm:$0xff]
    %v160 = vld [vmem:[#allocation5 + $0x70] sm:$0xff]
    %v161 = vld [vmem:[#allocation5 + $0x78] sm:$0xff]
    %v162 = vld [vmem:[#allocation5 + $0x80] sm:$0xff]
    %v163 = vld [vmem:[#allocation5 + $0x88] sm:$0xff]
    %v164 = vld [vmem:[#allocation5 + $0x90] sm:$0xff]
    %v165 = vld [vmem:[#allocation5 + $0x98] sm:$0xff]
    %v166 = vld [vmem:[#allocation5 + $0xa0] sm:$0xff]
    %v167 = vld [vmem:[#allocation5 + $0xa8] sm:$0xff]
    %v168 = vld [vmem:[#allocation5 + $0xb0] sm:$0xff]
    %v169 = vld [vmem:[#allocation5 + $0xb8] sm:$0xff]
    %v194 = vunpack.c.l.b16 %v146
    %v195 = vunpack.c.h.b16 %v146
    %v196 = vunpack.c.l.b16 %v147
    %v197 = vunpack.c.h.b16 %v147
    %v198 = vunpack.c.l.b16 %v148
    %v199 = vunpack.c.h.b16 %v148
    %v200 = vunpack.c.l.b16 %v149
    %v201 = vunpack.c.h.b16 %v149
    %v202 = vunpack.c.l.b16 %v150
    %v203 = vunpack.c.h.b16 %v150
    %v204 = vunpack.c.l.b16 %v151
    %v205 = vunpack.c.h.b16 %v151
    %v206 = vunpack.c.l.b16 %v152
    %v207 = vunpack.c.h.b16 %v152
    %v208 = vunpack.c.l.b16 %v153
    %v209 = vunpack.c.h.b16 %v153
    %v210 = vunpack.c.l.b16 %v154
    %v211 = vunpack.c.h.b16 %v154
    %v212 = vunpack.c.l.b16 %v155
    %v213 = vunpack.c.h.b16 %v155
    %v214 = vunpack.c.l.b16 %v156
    %v215 = vunpack.c.h.b16 %v156
    %v216 = vunpack.c.l.b16 %v157
    %v217 = vunpack.c.h.b16 %v157
    %v218 = vunpack.c.l.b16 %v158
    %v219 = vunpack.c.h.b16 %v158
    %v220 = vunpack.c.l.b16 %v159
    %v221 = vunpack.c.h.b16 %v159
    %v222 = vunpack.c.l.b16 %v160
    %v223 = vunpack.c.h.b16 %v160
    %v224 = vunpack.c.l.b16 %v161
    %v225 = vunpack.c.h.b16 %v161
    %v226 = vunpack.c.l.b16 %v162
    %v227 = vunpack.c.h.b16 %v162
    %v228 = vunpack.c.l.b16 %v163
    %v229 = vunpack.c.h.b16 %v163
    %v230 = vunpack.c.l.b16 %v164
    %v231 = vunpack.c.h.b16 %v164
    %v232 = vunpack.c.l.b16 %v165
    %v233 = vunpack.c.h.b16 %v165
    %v234 = vunpack.c.l.b16 %v166
    %v235 = vunpack.c.h.b16 %v166
    %v236 = vunpack.c.l.b16 %v167
    %v237 = vunpack.c.h.b16 %v167
    %v238 = vunpack.c.l.b16 %v168
    %v239 = vunpack.c.h.b16 %v168
    %v240 = vunpack.c.l.b16 %v169
    %v241 = vunpack.c.h.b16 %v169
    %v242 = vpack.c.b16 %v196, %v194
    %v243 = vpack.c.b16 %v197, %v195
    %v244 = vpack.c.b16 %v200, %v198
    %v245 = vpack.c.b16 %v201, %v199
    %v246 = vpack.c.b16 %v204, %v202
    %v247 = vpack.c.b16 %v205, %v203
    %v248 = vpack.c.b16 %v208, %v206
    %v249 = vpack.c.b16 %v209, %v207
    %v250 = vpack.c.b16 %v212, %v210
    %v251 = vpack.c.b16 %v213, %v211
    %v252 = vpack.c.b16 %v216, %v214
    %v253 = vpack.c.b16 %v217, %v215
    %v254 = vpack.c.b16 %v220, %v218
    %v255 = vpack.c.b16 %v221, %v219
    %v256 = vpack.c.b16 %v224, %v222
    %v257 = vpack.c.b16 %v225, %v223
    %v258 = vpack.c.b16 %v228, %v226
    %v259 = vpack.c.b16 %v229, %v227
    %v260 = vpack.c.b16 %v232, %v230
    %v261 = vpack.c.b16 %v233, %v231
    %v262 = vpack.c.b16 %v236, %v234
    %v263 = vpack.c.b16 %v237, %v235
    %v264 = vpack.c.b16 %v240, %v238
    %v265 = vpack.c.b16 %v241, %v239
    %v291 = vsel %vm139, %v131, 0
    %v294 = vsel %vm139, %v134, 0
    %296 = vmatprep.subr.bf16.mxu0 %v243
    %297 = vmatpush1.bf16.msra.mxu0 %v242
    %298 = vmatprep.subr.bf16.mxu0 %v245
    %299 = vmatpush1.bf16.msra.mxu0 %v244
    %300 = vmatprep.subr.bf16.mxu0 %v247
    %301 = vmatpush1.bf16.msra.mxu0 %v246
    %302 = vmatprep.subr.bf16.mxu0 %v249
    %303 = vmatpush1.bf16.msra.mxu0 %v248
    %304 = vmatprep.subr.bf16.mxu0 %v251
    %305 = vmatpush1.bf16.msra.mxu0 %v250
    %306 = vmatprep.subr.bf16.mxu0 %v253
    %307 = vmatpush1.bf16.msra.mxu0 %v252
    %308 = vmatprep.subr.bf16.mxu0 %v255
    %309 = vmatpush1.bf16.msra.mxu0 %v254
    %310 = vmatprep.subr.bf16.mxu0 %v257
    %311 = vmatpush1.bf16.msra.mxu0 %v256
    %312 = vmatprep.subr.bf16.mxu0 %v259
    %313 = vmatpush1.bf16.msra.mxu0 %v258
    %314 = vmatprep.subr.bf16.mxu0 %v261
    %315 = vmatpush1.bf16.msra.mxu0 %v260
    %316 = vmatprep.subr.bf16.mxu0 %v263
    %317 = vmatpush1.bf16.msra.mxu0 %v262
    %318 = vmatprep.subr.bf16.mxu0 %v265
    %319 = vmatpush1.bf16.msra.mxu0 %v264
    %320 = vmatprep.subr.bf16.mxu0 0
    %321 = vmatpush1.bf16.msra.mxu0 0
    %322 = vmatprep.subr.bf16.mxu0 0
    %323 = vmatpush1.bf16.msra.mxu0 0
    %324 = vmatprep.subr.bf16.mxu0 0
    %325 = vmatpush1.bf16.msra.mxu0 0
    %326 = vmatprep.subr.bf16.mxu0 0
    %327 = vmatpush1.bf16.msra.mxu0 0
    %328 = vmatprep.mubr.bf16.mxu0 %v291
    %329 = vmatmul.mubr.bf16.gmra.mrb[0].mxu0 %v141
    %v330 = vpop.f32.mrb[0].mxu0
    %v331 = vadd.f32 0.0, %v330
    %v332 = vpop.f32.mrb[0].mxu0
    %v333 = vadd.f32 0.0, %v332
    %v334 = vpop.f32.mrb[0].mxu0
    %v335 = vadd.f32 0.0, %v334
    %v336 = vpop.f32.mrb[0].mxu0
    %v337 = vadd.f32 0.0, %v336
    %338 = vmatprep.mubr.bf16.mxu0 %v294
    %339 = vmatmul.mubr.bf16.gmra.mrb[0].mxu0 %v144
    %v340 = vpop.f32.mrb[0].mxu0
    %v341 = vadd.f32 0.0, %v340
    %v342 = vpop.f32.mrb[0].mxu0
    %v343 = vadd.f32 0.0, %v342
    %v344 = vpop.f32.mrb[0].mxu0
    %v345 = vadd.f32 0.0, %v344
    %v346 = vpop.f32.mrb[0].mxu0
    %v347 = vadd.f32 0.0, %v346
    %348 = vdwg.mxu0
    %v349 = vld [vmem:[%s3] sm:$0x1]
    %v350 = vld [vmem:[%s3 + $0x1] sm:$0x1]
    %v351 = vlaneseq
    %v352 = vshrl.u32 %v351, 7
    %v353 = vsub.s32 0, %v352
    %v354 = vrot.slane %v349, %v353
    %v355 = vadd.f32 %v331, %v354
    %v356 = vadd.f32 %v335, %v354
    %v357 = vadd.f32 %v341, %v354
    %v358 = vadd.f32 %v345, %v354
    %v359 = vmax.f32 %v355, 0.0
    %v360 = vmax.f32 %v356, 0.0
    %v361 = vmax.f32 %v357, 0.0
    %v362 = vmax.f32 %v358, 0.0
    %v363 = vpack.c.bf16 %v360, %v359
    %v364 = vpack.c.bf16 %v362, %v361
    %v366 = vshrl.u32 %v363, 16
    %v368 = vrot.slane %v366, 7
    %v369 = vshll.u32 %v363, 16
    %v371 = vor.u32 %v368, %v369
    %v373 = vshrl.u32 %v364, 16
    %v375 = vrot.slane %v373, 7
    %v376 = vshll.u32 %v364, 16
    %v378 = vor.u32 %v375, %v376
    %v383 = vsel %vm94, 0, %v371
    %v384 = vsel %vm94, 0, %v378
    %v385 = vsel %vm94, %v368, 0
    %v386 = vsel %vm94, %v375, 0
    %v388 = vshrl.u32 %v383, 16
    %v390 = vshll.u32 %v383, 16
    %v392 = vrot.slane %v390, 1
    %v393 = vor.u32 %v388, %v392
    %v395 = vshll.u32 %v385, 16
    %v397 = vrot.slane %v395, 1
    %v398 = vsel %vm99, %v393, %v397
    %v400 = vshrl.u32 %v384, 16
    %v402 = vshll.u32 %v384, 16
    %v404 = vrot.slane %v402, 1
    %v405 = vor.u32 %v400, %v404
    %v407 = vshll.u32 %v386, 16
    %v409 = vrot.slane %v407, 1
    %v410 = vsel %vm99, %v405, %v409
    %v417 = vrot.slane %v383, 1
    %v418 = vrot.slane %v385, 1
    %v419 = vsel %vm128, %v417, %v418
    %v420 = vrot.slane %v384, 1
    %v421 = vrot.slane %v386, 1
    %v422 = vsel %vm128, %v420, %v421
    %v425 = vld [vmem:[#allocation7] sm:$0xf]
    %v426 = vld [vmem:[#allocation7 + $0x4] sm:$0xf]
    %v427 = vld [vmem:[#allocation7 + $0x8] sm:$0xf]
    %v428 = vld [vmem:[#allocation7 + $0xc] sm:$0xf]
    %v429 = vld [vmem:[#allocation7 + $0x10] sm:$0xf]
    %v430 = vld [vmem:[#allocation7 + $0x14] sm:$0xf]
    %v431 = vld [vmem:[#allocation7 + $0x18] sm:$0xf]
    %v432 = vld [vmem:[#allocation7 + $0x1c] sm:$0xf]
    %v433 = vld [vmem:[#allocation7 + $0x20] sm:$0xf]
    %v434 = vld [vmem:[#allocation7 + $0x24] sm:$0xf]
    %v435 = vld [vmem:[#allocation7 + $0x28] sm:$0xf]
    %v436 = vld [vmem:[#allocation7 + $0x2c] sm:$0xf]
    %v437 = vld [vmem:[#allocation7 + $0x30] sm:$0xf]
    %v438 = vld [vmem:[#allocation7 + $0x34] sm:$0xf]
    %v439 = vld [vmem:[#allocation7 + $0x38] sm:$0xf]
    %v440 = vld [vmem:[#allocation7 + $0x3c] sm:$0xf]
    %v441 = vld [vmem:[#allocation7 + $0x40] sm:$0xf]
    %v442 = vld [vmem:[#allocation7 + $0x44] sm:$0xf]
    %v443 = vld [vmem:[#allocation7 + $0x48] sm:$0xf]
    %v444 = vld [vmem:[#allocation7 + $0x4c] sm:$0xf]
    %v445 = vld [vmem:[#allocation7 + $0x50] sm:$0xf]
    %v446 = vld [vmem:[#allocation7 + $0x54] sm:$0xf]
    %v447 = vld [vmem:[#allocation7 + $0x58] sm:$0xf]
    %v448 = vld [vmem:[#allocation7 + $0x5c] sm:$0xf]
    %v449 = vld [vmem:[#allocation7 + $0x60] sm:$0xf]
    %v450 = vld [vmem:[#allocation7 + $0x64] sm:$0xf]
    %v451 = vld [vmem:[#allocation7 + $0x68] sm:$0xf]
    %v452 = vld [vmem:[#allocation7 + $0x6c] sm:$0xf]
    %v453 = vld [vmem:[#allocation7 + $0x70] sm:$0xf]
    %v454 = vld [vmem:[#allocation7 + $0x74] sm:$0xf]
    %v455 = vld [vmem:[#allocation7 + $0x78] sm:$0xf]
    %v456 = vld [vmem:[#allocation7 + $0x7c] sm:$0xf]
    %v457 = vld [vmem:[#allocation7 + $0x80] sm:$0xf]
    %v458 = vld [vmem:[#allocation7 + $0x84] sm:$0xf]
    %v459 = vld [vmem:[#allocation7 + $0x88] sm:$0xf]
    %v460 = vld [vmem:[#allocation7 + $0x8c] sm:$0xf]
    %v461 = vld [vmem:[#allocation7 + $0x90] sm:$0xf]
    %v462 = vld [vmem:[#allocation7 + $0x94] sm:$0xf]
    %v463 = vld [vmem:[#allocation7 + $0x98] sm:$0xf]
    %v464 = vld [vmem:[#allocation7 + $0x9c] sm:$0xf]
    %v465 = vld [vmem:[#allocation7 + $0xa0] sm:$0xf]
    %v466 = vld [vmem:[#allocation7 + $0xa4] sm:$0xf]
    %v467 = vld [vmem:[#allocation7 + $0xa8] sm:$0xf]
    %v468 = vld [vmem:[#allocation7 + $0xac] sm:$0xf]
    %v469 = vld [vmem:[#allocation7 + $0xb0] sm:$0xf]
    %v470 = vld [vmem:[#allocation7 + $0xb4] sm:$0xf]
    %v471 = vld [vmem:[#allocation7 + $0xb8] sm:$0xf]
    %v472 = vld [vmem:[#allocation7 + $0xbc] sm:$0xf]
    %v473 = vlaneseq
    %v474 = vshrl.u32 %v473, 7
    %v475 = vsub.s32 0, %v474
    %v476 = vrot.slane %v350, %v475
    %v525 = vunpack.c.l.b16 %v425
    %v526 = vunpack.c.l.b16 %v426
    %v527 = vunpack.c.l.b16 %v427
    %v528 = vunpack.c.l.b16 %v428
    %v529 = vunpack.c.l.b16 %v429
    %v530 = vunpack.c.l.b16 %v430
    %v531 = vunpack.c.l.b16 %v431
    %v532 = vunpack.c.l.b16 %v432
    %v533 = vunpack.c.l.b16 %v433
    %v534 = vunpack.c.l.b16 %v434
    %v535 = vunpack.c.l.b16 %v435
    %v536 = vunpack.c.l.b16 %v436
    %v537 = vunpack.c.l.b16 %v437
    %v538 = vunpack.c.l.b16 %v438
    %v539 = vunpack.c.l.b16 %v439
    %v540 = vunpack.c.l.b16 %v440
    %v541 = vunpack.c.l.b16 %v441
    %v542 = vunpack.c.l.b16 %v442
    %v543 = vunpack.c.l.b16 %v443
    %v544 = vunpack.c.l.b16 %v444
    %v545 = vunpack.c.l.b16 %v445
    %v546 = vunpack.c.l.b16 %v446
    %v547 = vunpack.c.l.b16 %v447
    %v548 = vunpack.c.l.b16 %v448
    %v549 = vunpack.c.l.b16 %v449
    %v550 = vunpack.c.l.b16 %v450
    %v551 = vunpack.c.l.b16 %v451
    %v552 = vunpack.c.l.b16 %v452
    %v553 = vunpack.c.l.b16 %v453
    %v554 = vunpack.c.l.b16 %v454
    %v555 = vunpack.c.l.b16 %v455
    %v556 = vunpack.c.l.b16 %v456
    %v557 = vunpack.c.l.b16 %v457
    %v558 = vunpack.c.l.b16 %v458
    %v559 = vunpack.c.l.b16 %v459
    %v560 = vunpack.c.l.b16 %v460
    %v561 = vunpack.c.l.b16 %v461
    %v562 = vunpack.c.l.b16 %v462
    %v563 = vunpack.c.l.b16 %v463
    %v564 = vunpack.c.l.b16 %v464
    %v565 = vunpack.c.l.b16 %v465
    %v566 = vunpack.c.l.b16 %v466
    %v567 = vunpack.c.l.b16 %v467
    %v568 = vunpack.c.l.b16 %v468
    %v569 = vunpack.c.l.b16 %v469
    %v570 = vunpack.c.l.b16 %v470
    %v571 = vunpack.c.l.b16 %v471
    %v572 = vunpack.c.l.b16 %v472
    %v573 = vpack.c.b16 %v526, %v525
    %v574 = vpack.c.b16 %v528, %v527
    %v575 = vpack.c.b16 %v530, %v529
    %v576 = vpack.c.b16 %v532, %v531
    %v577 = vpack.c.b16 %v534, %v533
    %v578 = vpack.c.b16 %v536, %v535
    %v579 = vpack.c.b16 %v538, %v537
    %v580 = vpack.c.b16 %v540, %v539
    %v581 = vpack.c.b16 %v542, %v541
    %v582 = vpack.c.b16 %v544, %v543
    %v583 = vpack.c.b16 %v546, %v545
    %v584 = vpack.c.b16 %v548, %v547
    %v585 = vpack.c.b16 %v550, %v549
    %v586 = vpack.c.b16 %v552, %v551
    %v587 = vpack.c.b16 %v554, %v553
    %v588 = vpack.c.b16 %v556, %v555
    %v589 = vpack.c.b16 %v558, %v557
    %v590 = vpack.c.b16 %v560, %v559
    %v591 = vpack.c.b16 %v562, %v561
    %v592 = vpack.c.b16 %v564, %v563
    %v593 = vpack.c.b16 %v566, %v565
    %v594 = vpack.c.b16 %v568, %v567
    %v595 = vpack.c.b16 %v570, %v569
    %v596 = vpack.c.b16 %v572, %v571
    %621 = vmatprep.subr.bf16.mxu0 0
    %622 = vmatpush1.bf16.msra.mxu0 %v573
    %623 = vmatprep.subr.bf16.mxu0 0
    %624 = vmatpush1.bf16.msra.mxu0 %v574
    %625 = vmatprep.subr.bf16.mxu0 0
    %626 = vmatpush1.bf16.msra.mxu0 %v575
    %627 = vmatprep.subr.bf16.mxu0 0
    %628 = vmatpush1.bf16.msra.mxu0 %v576
    %629 = vmatprep.subr.bf16.mxu0 0
    %630 = vmatpush1.bf16.msra.mxu0 %v577
    %631 = vmatprep.subr.bf16.mxu0 0
    %632 = vmatpush1.bf16.msra.mxu0 %v578
    %633 = vmatprep.subr.bf16.mxu0 0
    %634 = vmatpush1.bf16.msra.mxu0 %v579
    %635 = vmatprep.subr.bf16.mxu0 0
    %636 = vmatpush1.bf16.msra.mxu0 %v580
    %637 = vmatprep.subr.bf16.mxu0 0
    %638 = vmatpush1.bf16.msra.mxu0 %v581
    %639 = vmatprep.subr.bf16.mxu0 0
    %640 = vmatpush1.bf16.msra.mxu0 %v582
    %641 = vmatprep.subr.bf16.mxu0 0
    %642 = vmatpush1.bf16.msra.mxu0 %v583
    %643 = vmatprep.subr.bf16.mxu0 0
    %644 = vmatpush1.bf16.msra.mxu0 %v584
    %645 = vmatprep.subr.bf16.mxu0 0
    %646 = vmatpush1.bf16.msra.mxu0 %v585
    %647 = vmatprep.subr.bf16.mxu0 0
    %648 = vmatpush1.bf16.msra.mxu0 %v586
    %649 = vmatprep.subr.bf16.mxu0 0
    %650 = vmatpush1.bf16.msra.mxu0 %v587
    %651 = vmatprep.subr.bf16.mxu0 0
    %652 = vmatpush1.bf16.msra.mxu0 %v588
    %653 = vmatprep.mubr.bf16.mxu0 %v398
    %654 = vmatmul.mubr.bf16.gmra.mrb[0].mxu0 %v383
    %v655 = vpop.f32.mrb[0].mxu0
    %v656 = vadd.f32 %v476, %v655
    %v657 = vpop.f32.mrb[0].mxu0
    %v658 = vpop.f32.mrb[0].mxu0
    %v659 = vadd.f32 %v476, %v658
    %v660 = vpop.f32.mrb[0].mxu0
    %661 = vmatprep.mubr.bf16.mxu0 %v410
    %662 = vmatmul.mubr.bf16.gmra.mrb[0].mxu0 %v384
    %v663 = vpop.f32.mrb[0].mxu0
    %v664 = vadd.f32 %v476, %v663
    %v665 = vpop.f32.mrb[0].mxu0
    %v666 = vpop.f32.mrb[0].mxu0
    %v667 = vadd.f32 %v476, %v666
    %v668 = vpop.f32.mrb[0].mxu0
    %669 = vdwg.mxu0
    %670 = vmatprep.subr.bf16.mxu0 0
    %671 = vmatpush1.bf16.msra.mxu0 %v589
    %672 = vmatprep.subr.bf16.mxu0 0
    %673 = vmatpush1.bf16.msra.mxu0 %v590
    %674 = vmatprep.subr.bf16.mxu0 0
    %675 = vmatpush1.bf16.msra.mxu0 %v591
    %676 = vmatprep.subr.bf16.mxu0 0
    %677 = vmatpush1.bf16.msra.mxu0 %v592
    %678 = vmatprep.subr.bf16.mxu0 0
    %679 = vmatpush1.bf16.msra.mxu0 %v593
    %680 = vmatprep.subr.bf16.mxu0 0
    %681 = vmatpush1.bf16.msra.mxu0 %v594
    %682 = vmatprep.subr.bf16.mxu0 0
    %683 = vmatpush1.bf16.msra.mxu0 %v595
    %684 = vmatprep.subr.bf16.mxu0 0
    %685 = vmatpush1.bf16.msra.mxu0 %v596
    %686 = vmatprep.subr.bf16.mxu0 0
    %687 = vmatpush1.bf16.msra.mxu0 0
    %688 = vmatprep.subr.bf16.mxu0 0
    %689 = vmatpush1.bf16.msra.mxu0 0
    %690 = vmatprep.subr.bf16.mxu0 0
    %691 = vmatpush1.bf16.msra.mxu0 0
    %692 = vmatprep.subr.bf16.mxu0 0
    %693 = vmatpush1.bf16.msra.mxu0 0
    %694 = vmatprep.subr.bf16.mxu0 0
    %695 = vmatpush1.bf16.msra.mxu0 0
    %696 = vmatprep.subr.bf16.mxu0 0
    %697 = vmatpush1.bf16.msra.mxu0 0
    %698 = vmatprep.subr.bf16.mxu0 0
    %699 = vmatpush1.bf16.msra.mxu0 0
    %700 = vmatprep.subr.bf16.mxu0 0
    %701 = vmatpush1.bf16.msra.mxu0 0
    %702 = vmatprep.mubr.bf16.mxu0 0
    %703 = vmatmul.mubr.bf16.gmra.mrb[0].mxu0 %v419
    %v704 = vpop.f32.mrb[0].mxu0
    %v705 = vadd.f32 %v656, %v704
    %v706 = vpop.f32.mrb[0].mxu0
    %v707 = vpop.f32.mrb[0].mxu0
    %v708 = vadd.f32 %v659, %v707
    %v709 = vpop.f32.mrb[0].mxu0
    %710 = vmatprep.mubr.bf16.mxu0 0
    %711 = vmatmul.mubr.bf16.gmra.mrb[0].mxu0 %v422
    %v712 = vpop.f32.mrb[0].mxu0
    %v713 = vadd.f32 %v664, %v712
    %v714 = vpop.f32.mrb[0].mxu0
    %v715 = vpop.f32.mrb[0].mxu0
    %v716 = vadd.f32 %v667, %v715
    %v717 = vpop.f32.mrb[0].mxu0
    %718 = vdwg.mxu0
    %v719 = vmax.f32 %v705, 0.0
    %v720 = vmax.f32 %v708, 0.0
    %v721 = vmax.f32 %v713, 0.0
    %v722 = vmax.f32 %v716, 0.0
    %v723 = vadd.f32 %v333, %v719
    %v724 = vadd.f32 %v337, %v720
    %v725 = vadd.f32 %v343, %v721
    %v726 = vadd.f32 %v347, %v722
    %727 = vst [vmem:[#allocation8] sm:$0xff] %v723
    %728 = vst [vmem:[#allocation8 + $0x8] sm:$0xff] %v724
    %729 = vst [vmem:[#allocation8 + $0x10] sm:$0xff] %v725
    %730 = vst [vmem:[#allocation8 + $0x18] sm:$0xff] %v726
    // Predicated region
    $region30: #{tpu_custom_call.1} parent=1 // pred_check
      _
    $region31: #{tpu_custom_call.1} parent=1 // pred_check_branch
      %732 = sbr.rel (0) target = $region33
    $region32: #{tpu_custom_call.1} parent=1 // pred_region
      %s734 = ssub.s32 512, 512
      %735 = vsyncadd [#allocation4], %s734
      %s736 = sshll.u32 [#allocation8], 4
      %s737 = int_to_ptr.vmem [resolvable:$true] %s736
      %742 = dma.vmem_to_hbm [thread:$0]  %s737, 512, %s4, [#allocation4], 128, 128, 8
    $region33: #{tpu_custom_call.1} parent=1 // pred_fallthru
      _
    // Predicated region
    $region34: #{tpu_custom_call.1} parent=1 // pred_check
      _
    $region35: #{tpu_custom_call.1} parent=1 // pred_check_branch
      %744 = sbr.rel (0) target = $region37
    $region36: #{tpu_custom_call.1} parent=1 // pred_region
      %745 = dma.done [#allocation4], 512
    $region37: #{tpu_custom_call.1} parent=1 // pred_fallthru
      _
    %746 = vsyncpa [#allocation3], 1
    %747 = vsyncpa [#allocation6], 1
    %748 = vsyncpa [#allocation4], 1

</llo_original>
